<compile_context>
chip_gen: v6e
topology: v6e:2x2x1
jax: 0.10.0
libtpu: 0.0.40
codegen_flags: <defaults>
</compile_context>

<pallas_src>
import jax
import jax.numpy as jnp
from jax.experimental import pallas as pl
from jax.experimental.pallas import tpu as pltpu


def fm_kernel(gb_ref, x_ref, v1_ref, v2_ref, w2_ref, out_ref):
    x = x_ref[...]                      # (TB, N)  f32
    v1 = v1_ref[...]                    # (1, N)   f32  (V1 as a row)
    v2 = v2_ref[...]                    # (N, Kp)  f32  (V2 zero-padded to lane width)
    w2 = w2_ref[...]                    # (1, N)   f32  (sum_K V2^2, precomputed)

    x2 = x * x

    # Linear term + (-0.5 * sum_K out_2) fused into one VPU/XLU reduction:
    #   sum_n x*V1 - 0.5 * sum_n x^2 * sum_K(V2^2)
    lin_and_sq = jnp.sum(x * v1 - 0.5 * x2 * w2, axis=-1, keepdims=True)   # (TB, 1)

    # Single remaining MXU matmul.
    out_1 = jnp.dot(x, v2, preferred_element_type=jnp.float32)             # (TB, Kp)
    interaction = 0.5 * jnp.sum(out_1 * out_1, axis=-1, keepdims=True)     # (TB, 1)

    # Dropout: identity (eval mode)
    out_ref[...] = lin_and_sq + interaction + gb_ref[0]


def torch_fm_forward(x, v1, v2, global_bias, *, tb=512):
    """x: (B, N) f32, v1: (N, 1), v2: (N, K), global_bias: (1,) f32 -> (B, 1)."""
    B, N = x.shape
    K = v2.shape[1]

    # ---- Hoisted, per-call constant weight math (never recomputed per tile) ----
    v1_row = v1.reshape(1, N).astype(jnp.float32)
    w2 = jnp.sum(v2.astype(jnp.float32) ** 2, axis=1).reshape(1, N)

    # Zero-pad K to lane width 128: zero columns add exactly 0 after square+sum.
    Kp = max(128, ((K + 127) // 128) * 128)
    v2_pad = v2.astype(jnp.float32)
    if Kp != K:
        v2_pad = jnp.pad(v2_pad, ((0, 0), (0, Kp - K)))

    # ---- Batch tiling (TB rows per grid step, multiple of 8 sublanes) ----
    b8 = ((B + 7) // 8) * 8
    tb = min(max(8, (tb // 8) * 8), b8)
    Bp = ((B + tb - 1) // tb) * tb
    x_p = x.astype(jnp.float32)
    if Bp != B:
        x_p = jnp.pad(x_p, ((0, Bp - B), (0, 0)))   # zero rows -> discarded below
    grid = (Bp // tb,)

    # Compiler params: parallel batch axis (2 TCs on v7x); raise scoped VMEM only
    # when the double-buffered x tile + resident weights actually need it.
    params = {"dimension_semantics": ("parallel",)}
    vmem_need = 2 * tb * N * 4 + N * Kp * 4 + 4 * N * 4 + 4 * tb * 4
    if vmem_need > 12 * 1024 * 1024:
        params["vmem_limit_bytes"] = min(int(vmem_need * 2.5), 60 * 1024 * 1024)

    out = pl.pallas_call(
        fm_kernel,
        out_shape=jax.ShapeDtypeStruct((Bp, 1), jnp.float32),
        grid=grid,
        in_specs=[
            pl.BlockSpec(memory_space=pltpu.MemorySpace.SMEM),    # global_bias scalar
            pl.BlockSpec((tb, N), lambda i: (i, 0)),              # x: streamed over batch
            pl.BlockSpec((1, N), lambda i: (0, 0)),               # V1 row (resident)
            pl.BlockSpec((N, Kp), lambda i: (0, 0)),              # V2 padded (resident)
            pl.BlockSpec((1, N), lambda i: (0, 0)),               # sum_K V2^2 (resident)
        ],
        out_specs=pl.BlockSpec((tb, 1), lambda i: (i, 0)),
        compiler_params=pltpu.CompilerParams(**params),
    )(global_bias, x_p, v1_row, v2_pad, w2)

    return out[:B]


def torch_fm_reference(x, v1, v2, global_bias):
    one = x @ v1
    out_1 = x @ v2
    out_2 = (x ** 2) @ (v2 ** 2)
    out_3 = 0.5 * (out_1 ** 2 - out_2)
    return one + jnp.sum(out_3, axis=1, keepdims=True) + global_bias[0]


if __name__ == "__main__":
    # Small shapes consistent with the module defaults: n=600 features, k=8 factors.
    # B=10 (not a multiple of the tile) exercises both padding and a 2-step grid.
    B, N, K = 10, 600, 8

    key = jax.random.PRNGKey(0)
    kx, kv1, kv2 = jax.random.split(key, 3)

    x = jax.random.normal(kx, (B, N), dtype=jnp.float32)
    # Match torch's uniform_(-0.1, 0.1) init deterministically.
    v1 = jax.random.uniform(kv1, (N, 1), dtype=jnp.float32, minval=-0.1, maxval=0.1)
    v2 = jax.random.uniform(kv2, (N, K), dtype=jnp.float32, minval=-0.1, maxval=0.1)
    global_bias = jnp.zeros((1,), dtype=jnp.float32)

    out = torch_fm_forward(x, v1, v2, global_bias, tb=8)
    out = jax.block_until_ready(out)

    ref = torch_fm_reference(x, v1, v2, global_bias)
    assert out.shape == (B, 1)
    assert jnp.allclose(out, ref, atol=1e-4, rtol=1e-4), (
        f"max abs err {jnp.max(jnp.abs(out - ref))}"
    )

    print("KERNEL_OK")
</pallas_src>

<mosaic_0001>
module attributes {stable_mosaic.version = 11 : i64} {
  func.func @fm_kernel(%arg0: i32, %arg1: memref<1xf32, #tpu.memory_space<smem>>, %arg2: memref<8x600xf32, #tpu.memory_space<vmem>>, %arg3: memref<1x600xf32, #tpu.memory_space<vmem>>, %arg4: memref<600x128xf32, #tpu.memory_space<vmem>>, %arg5: memref<1x600xf32, #tpu.memory_space<vmem>>, %arg6: memref<8x1xf32, #tpu.memory_space<vmem>>) attributes {dimension_semantics = [#tpu.dimension_semantics<parallel>], iteration_bounds = array<i64: 2>, scalar_prefetch = 0 : i64, scratch_operands = 0 : i64, tpu.core_type = #tpu.core_type<tc>, window_params = [{transform_indices = @transform_0, window_bounds = array<i64: 1>}, {transform_indices = @transform_1, window_bounds = array<i64: 8, 600>}, {pipeline_mode = #tpu.pipeline_mode<synchronous>, transform_indices = @transform_2, window_bounds = array<i64: 1, 600>}, {pipeline_mode = #tpu.pipeline_mode<synchronous>, transform_indices = @transform_3, window_bounds = array<i64: 600, 128>}, {pipeline_mode = #tpu.pipeline_mode<synchronous>, transform_indices = @transform_4, window_bounds = array<i64: 1, 600>}, {transform_indices = @transform_5, window_bounds = array<i64: 8, 1>}]} {
    %c0 = arith.constant 0 : index
    %c0_0 = arith.constant 0 : index
    %0 = vector.load %arg2[%c0, %c0_0] : memref<8x600xf32, #tpu.memory_space<vmem>>, vector<8x600xf32>
    %c0_1 = arith.constant 0 : index
    %c0_2 = arith.constant 0 : index
    %1 = vector.load %arg3[%c0_1, %c0_2] : memref<1x600xf32, #tpu.memory_space<vmem>>, vector<1x600xf32>
    %c0_3 = arith.constant 0 : index
    %c0_4 = arith.constant 0 : index
    %2 = vector.load %arg4[%c0_3, %c0_4] : memref<600x128xf32, #tpu.memory_space<vmem>>, vector<600x128xf32>
    %c0_5 = arith.constant 0 : index
    %c0_6 = arith.constant 0 : index
    %3 = vector.load %arg5[%c0_5, %c0_6] : memref<1x600xf32, #tpu.memory_space<vmem>>, vector<1x600xf32>
    %4 = arith.mulf %0, %0 : vector<8x600xf32>
    %5 = vector.broadcast %1 : vector<1x600xf32> to vector<8x600xf32>
    %6 = arith.mulf %0, %5 : vector<8x600xf32>
    %cst = arith.constant 5.000000e-01 : f32
    %7 = vector.broadcast %cst : f32 to vector<8x600xf32>
    %8 = arith.mulf %7, %4 : vector<8x600xf32>
    %9 = vector.broadcast %3 : vector<1x600xf32> to vector<8x600xf32>
    %10 = arith.mulf %8, %9 : vector<8x600xf32>
    %11 = arith.subf %6, %10 : vector<8x600xf32>
    %cst_7 = arith.constant dense<0.000000e+00> : vector<8xf32>
    %12 = vector.multi_reduction <add>, %11, %cst_7 [1] : vector<8x600xf32> to vector<8xf32>
    %13 = vector.shape_cast %12 : vector<8xf32> to vector<8x1xf32>
    %cst_8 = arith.constant dense<0.000000e+00> : vector<8x128xf32>
    %14 = tpu.matmul %0, %2, %cst_8 {dimension_numbers = #tpu.dot_dimension_numbers<[1], [0], [0], [1], [0, 0, 1, 1], [], []>} : vector<8x600xf32>, vector<600x128xf32>, vector<8x128xf32> -> vector<8x128xf32>
    %15 = arith.mulf %14, %14 : vector<8x128xf32>
    %cst_9 = arith.constant dense<0.000000e+00> : vector<8xf32>
    %16 = vector.multi_reduction <add>, %15, %cst_9 [1] : vector<8x128xf32> to vector<8xf32>
    %17 = vector.shape_cast %16 : vector<8xf32> to vector<8x1xf32>
    %cst_10 = arith.constant 5.000000e-01 : f32
    %18 = vector.broadcast %cst_10 : f32 to vector<8x1xf32>
    %19 = arith.mulf %18, %17 : vector<8x1xf32>
    %20 = arith.addf %13, %19 : vector<8x1xf32>
    %c0_11 = arith.constant 0 : index
    %21 = memref.load %arg1[%c0_11] : memref<1xf32, #tpu.memory_space<smem>>
    %22 = vector.broadcast %21 : f32 to vector<8x1xf32>
    %23 = arith.addf %20, %22 : vector<8x1xf32>
    %c0_12 = arith.constant 0 : index
    %c0_13 = arith.constant 0 : index
    %24 = vector.load %arg6[%c0_12, %c0_13] : memref<8x1xf32, #tpu.memory_space<vmem>>, vector<8x1xf32>
    tpu.vector_store %arg6[%c0_12, %c0_13], %23 {strides = array<i32>} : memref<8x1xf32, #tpu.memory_space<vmem>>, vector<8x1xf32>,
    return
  }
  func.func @transform_0(%arg0: i32) -> i32 {
    %c0_i32 = arith.constant 0 : i32
    %c0_i32_0 = arith.constant 0 : i32
    return %c0_i32 : i32
  }
  func.func @transform_1(%arg0: i32) -> (i32, i32) {
    %c0_i32 = arith.constant 0 : i32
    %c0_i32_0 = arith.constant 0 : i32
    return %arg0, %c0_i32 : i32, i32
  }
  func.func @transform_2(%arg0: i32) -> (i32, i32) {
    %c0_i32 = arith.constant 0 : i32
    %c0_i32_0 = arith.constant 0 : i32
    %c0_i32_1 = arith.constant 0 : i32
    return %c0_i32, %c0_i32_0 : i32, i32
  }
  func.func @transform_3(%arg0: i32) -> (i32, i32) {
    %c0_i32 = arith.constant 0 : i32
    %c0_i32_0 = arith.constant 0 : i32
    %c0_i32_1 = arith.constant 0 : i32
    return %c0_i32, %c0_i32_0 : i32, i32
  }
  func.func @transform_4(%arg0: i32) -> (i32, i32) {
    %c0_i32 = arith.constant 0 : i32
    %c0_i32_0 = arith.constant 0 : i32
    %c0_i32_1 = arith.constant 0 : i32
    return %c0_i32, %c0_i32_0 : i32, i32
  }
  func.func @transform_5(%arg0: i32) -> (i32, i32) {
    %c0_i32 = arith.constant 0 : i32
    %c0_i32_0 = arith.constant 0 : i32
    return %arg0, %c0_i32 : i32, i32
  }
}

</mosaic_0001>

<llo_original>
// kernel: tpu_custom_call.1
$region0: #{tpu_custom_call.1}
  #allocation0 [shape = 'u32[]', space=smem, size = 0x4, offset = 0x4, fixed_abs, tag = 'smem constant byte address 0x4 - core index']
  #allocation1 [shape = 'u32[144,128]{1,0:T(1,128)}', space=vmem, size = 0x12000, scoped, tag = 'internal scratch']
  #allocation2 [shape = 'f32[1]{0:T(128)S(6)}', space=smem, size = 0x200, scoped, tag = 'scoped memory for tpu_custom_call.1']
  %s0 = inlined_call_operand.<no memory space> [shape: f32[1], index: 0, kind: input, shape index: {}]
  %s1 = inlined_call_operand.hbm [shape: f32[16,600], index: 1, kind: input, shape index: {}]
  %s2 = inlined_call_operand.hbm [shape: f32[1,600], index: 2, kind: input, shape index: {}]
  %s3 = inlined_call_operand.hbm [shape: f32[600,128], index: 3, kind: input, shape index: {}]
  %s4 = inlined_call_operand.vmem [shape: f32[1,600], index: 4, kind: input, shape index: {}]
  %s5 = inlined_call_operand.vmem [shape: f32[16,1], index: 5, kind: output, shape index: {}]
  %s6 = sld [smem:[#allocation0]]
  $region65: #{tpu_custom_call.1} parent=0
    _
  %s8 = ssub.s32 1, %s6
  %s9 = scalar_select 0, %s8, %s6
  %10 = sst [smem:[#allocation2]] %s0
  $region1: #{tpu_custom_call.1} parent=0
    #allocation3 [shape = 'u8[40960]{0}', space=vmem, size = 0xa000, scoped, tag = 'input window, operand 1']
    #allocation4 [shape = 's32[2]{0}', space=sflag, size = 0x8, scoped, tag = 'scoped memory for tpu_custom_call.1']
    #allocation5 [shape = 'u8[2560]{0}', space=vmem, size = 0xc00, scoped, tag = 'input window, operand 2, single buffered']
    #allocation6 [shape = 's32[1]{0}', space=sflag, size = 0x4, scoped, tag = 'scoped memory for tpu_custom_call.1']
    #allocation7 [shape = 'u8[307200]{0}', space=vmem, size = 0x4b000, scoped, tag = 'input window, operand 3, single buffered']
    %11 = vsyncpa [#allocation4], 0
    %s12 = scalar_lea.sflag [#allocation4], 1
    %13 = vsyncpa %s12, 0
    %14 = vsyncpa [#allocation6], 0
    loop: start=0, step=1, limit=4
    $region2: #{tpu_custom_call.1} parent=1 // loop_pre_header
      _
    $region3: #{tpu_custom_call.1} parent=1 // loop_header
      %s16 = sphi 0, %s20
      %p17 = scmp.ge.s32.totalorder %s16, 4
      %s24 = sphi 0, %s24
      %s26 = sphi 0, %s24
      %s27 = sphi 0, %s26
      %s41 = sphi 0, %s27
      %s47 = sphi 0, %s49
      %s50 = sphi 0, %s47
      %s51 = sphi 0, %s50
      %s67 = sphi 0, %s51
      %s71 = sphi 0, %s71
      %s73 = sphi 0, %s71
      %s74 = sphi 0, %s73
      %s88 = sphi 0, %s74
      %s92 = sphi 0, %s92
      %s94 = sphi 0, %s92
      %s95 = sphi 0, %s94
      %s109 = sphi 0, %s95
      %s113 = sphi 0, %s113
      %s115 = sphi 0, %s113
      %s116 = sphi 0, %s115
      %s130 = sphi 0, %s116
      %s136 = sphi 0, %s138
      %s139 = sphi 0, %s136
      %s140 = sphi 0, %s139
      %s156 = sphi 0, %s140
    $region4: #{tpu_custom_call.1} parent=1 // loop_header_branch
      %19 = sbr.rel (%p17) target = $region8
    $region5: #{tpu_custom_call.1} parent=1 // loop_body
      %s21 = ssub.s32 %s16, 1
      %s22 = ssub.s32 %s16, 2
      %s23 = sadd.s32 %s16, 1
      %s25 = sadd.s32 %s24, 1
      %p28 = scmp.eq.s32.totalorder %s16, 1
      %p29 = scmp.ne.s32.totalorder %s24, %s26
      %p30 = scmp.eq.s32.totalorder %s16, 0
      %p31 = por %p29, %p30
      %p32 = scmp.ne.s32.totalorder %s24, %s26
      %p33 = scmp.eq.s32.totalorder %s21, 1
      %p34 = por %p32, %p33
      %p35 = scmp.ne.s32.totalorder %s26, %s27
      %p36 = scmp.eq.s32.totalorder %s21, 0
      %p37 = por %p35, %p36
      %p38 = scmp.ne.s32.totalorder %s26, %s27
      %p39 = scmp.eq.s32.totalorder %s22, 1
      %p40 = por %p38, %p39
      %p42 = scmp.ne.s32.totalorder %s27, %s41
      %p43 = scmp.eq.s32.totalorder %s22, 0
      %p44 = por %p42, %p43
      %s45 = ssub.s32 %s16, %s23
      %p46 = scmp.eq.s32.totalorder %s45, 0
      %s48 = sadd.s32 %s47, 1
      %s49 = scalar_select %p46, %s47, %s48
      %p52 = pneg %p46
      %p53 = scmp.eq.s32.totalorder %s16, 1
      %p54 = por %p52, %p53
      %p55 = scmp.ne.s32.totalorder %s47, %s50
      %p56 = scmp.eq.s32.totalorder %s16, 0
      %p57 = por %p55, %p56
      %p58 = scmp.ne.s32.totalorder %s47, %s50
      %p59 = scmp.eq.s32.totalorder %s21, 1
      %p60 = por %p58, %p59
      %p61 = scmp.ne.s32.totalorder %s50, %s51
      %p62 = scmp.eq.s32.totalorder %s21, 0
      %p63 = por %p61, %p62
      %p64 = scmp.ne.s32.totalorder %s50, %s51
      %p65 = scmp.eq.s32.totalorder %s22, 1
      %p66 = por %p64, %p65
      %p68 = scmp.ne.s32.totalorder %s51, %s67
      %p69 = scmp.eq.s32.totalorder %s22, 0
      %p70 = por %p68, %p69
      %s72 = sadd.s32 %s71, 1
      %p75 = scmp.eq.s32.totalorder %s16, 1
      %p76 = scmp.ne.s32.totalorder %s71, %s73
      %p77 = scmp.eq.s32.totalorder %s16, 0
      %p78 = por %p76, %p77
      %p79 = scmp.ne.s32.totalorder %s71, %s73
      %p80 = scmp.eq.s32.totalorder %s21, 1
      %p81 = por %p79, %p80
      %p82 = scmp.ne.s32.totalorder %s73, %s74
      %p83 = scmp.eq.s32.totalorder %s21, 0
      %p84 = por %p82, %p83
      %p85 = scmp.ne.s32.totalorder %s73, %s74
      %p86 = scmp.eq.s32.totalorder %s22, 1
      %p87 = por %p85, %p86
      %p89 = scmp.ne.s32.totalorder %s74, %s88
      %p90 = scmp.eq.s32.totalorder %s22, 0
      %p91 = por %p89, %p90
      %s93 = sadd.s32 %s92, 1
      %p96 = scmp.eq.s32.totalorder %s16, 1
      %p97 = scmp.ne.s32.totalorder %s92, %s94
      %p98 = scmp.eq.s32.totalorder %s16, 0
      %p99 = por %p97, %p98
      %p100 = scmp.ne.s32.totalorder %s92, %s94
      %p101 = scmp.eq.s32.totalorder %s21, 1
      %p102 = por %p100, %p101
      %p103 = scmp.ne.s32.totalorder %s94, %s95
      %p104 = scmp.eq.s32.totalorder %s21, 0
      %p105 = por %p103, %p104
      %p106 = scmp.ne.s32.totalorder %s94, %s95
      %p107 = scmp.eq.s32.totalorder %s22, 1
      %p108 = por %p106, %p107
      %p110 = scmp.ne.s32.totalorder %s95, %s109
      %p111 = scmp.eq.s32.totalorder %s22, 0
      %p112 = por %p110, %p111
      %s114 = sadd.s32 %s113, 1
      %p117 = scmp.eq.s32.totalorder %s16, 1
      %p118 = scmp.ne.s32.totalorder %s113, %s115
      %p119 = scmp.eq.s32.totalorder %s16, 0
      %p120 = por %p118, %p119
      %p121 = scmp.ne.s32.totalorder %s113, %s115
      %p122 = scmp.eq.s32.totalorder %s21, 1
      %p123 = por %p121, %p122
      %p124 = scmp.ne.s32.totalorder %s115, %s116
      %p125 = scmp.eq.s32.totalorder %s21, 0
      %p126 = por %p124, %p125
      %p127 = scmp.ne.s32.totalorder %s115, %s116
      %p128 = scmp.eq.s32.totalorder %s22, 1
      %p129 = por %p127, %p128
      %p131 = scmp.ne.s32.totalorder %s116, %s130
      %p132 = scmp.eq.s32.totalorder %s22, 0
      %p133 = por %p131, %p132
      %s134 = ssub.s32 %s16, %s23
      %p135 = scmp.eq.s32.totalorder %s134, 0
      %s137 = sadd.s32 %s136, 1
      %s138 = scalar_select %p135, %s136, %s137
      %p141 = pneg %p135
      %p142 = scmp.eq.s32.totalorder %s16, 1
      %p143 = por %p141, %p142
      %p144 = scmp.ne.s32.totalorder %s136, %s139
      %p145 = scmp.eq.s32.totalorder %s16, 0
      %p146 = por %p144, %p145
      %p147 = scmp.ne.s32.totalorder %s136, %s139
      %p148 = scmp.eq.s32.totalorder %s21, 1
      %p149 = por %p147, %p148
      %p150 = scmp.ne.s32.totalorder %s139, %s140
      %p151 = scmp.eq.s32.totalorder %s21, 0
      %p152 = por %p150, %p151
      %p153 = scmp.ne.s32.totalorder %s139, %s140
      %p154 = scmp.eq.s32.totalorder %s22, 1
      %p155 = por %p153, %p154
      %p157 = scmp.ne.s32.totalorder %s140, %s156
      %p158 = scmp.eq.s32.totalorder %s22, 0
      %p159 = por %p157, %p158
      %p160 = scmp.le.s32.totalorder 1, %s16
      %p161 = scmp.lt.s32.totalorder %s16, 3
      %p162 = pnand %p160, %p161
      %p163 = pneg %p162
      // Predicated region
      $region9: #{tpu_custom_call.1} parent=5 // pred_check
        _
      $region10: #{tpu_custom_call.1} parent=5 // pred_check_branch
        %165 = sbr.rel (%p162) target = $region12
      $region11: #{tpu_custom_call.1} parent=5 // pred_region
        %s166 = ssub.s32 %s16, 1
        // Predicated region
        $region13: #{tpu_custom_call.1} parent=11 // pred_check
          %p167 = pneg %p37
        $region14: #{tpu_custom_call.1} parent=11 // pred_check_branch
          %169 = sbr.rel (%p167) target = $region16
        $region15: #{tpu_custom_call.1} parent=11 // pred_region
          _
        $region16: #{tpu_custom_call.1} parent=11 // pred_fallthru
          _
        // Predicated region
        $region17: #{tpu_custom_call.1} parent=11 // pred_check
          %p170 = pneg %p84
        $region18: #{tpu_custom_call.1} parent=11 // pred_check_branch
          %172 = sbr.rel (%p170) target = $region20
        $region19: #{tpu_custom_call.1} parent=11 // pred_region
          %s174 = ssub.s32 80, 80
          %175 = vsyncadd [#allocation6], %s174
          %s177 = sshll.u32 [#allocation5], 4
          %s178 = int_to_ptr.vmem [resolvable:$true] %s177
          %180 = dma.hbm_to_vmem [thread:$0]  %s2, 80, %s178, [#allocation6]
        $region20: #{tpu_custom_call.1} parent=11 // pred_fallthru
          _
        // Predicated region
        $region21: #{tpu_custom_call.1} parent=11 // pred_check
          %p181 = pneg %p105
        $region22: #{tpu_custom_call.1} parent=11 // pred_check_branch
          %183 = sbr.rel (%p181) target = $region24
        $region23: #{tpu_custom_call.1} parent=11 // pred_region
          %s185 = ssub.s32 9600, 9600
          %186 = vsyncadd [#allocation6], %s185
          %s187 = sshll.u32 [#allocation7], 4
          %s188 = int_to_ptr.vmem [resolvable:$true] %s187
          %193 = dma.hbm_to_vmem [thread:$0]  %s3, 9600, %s188, [#allocation6], 128, 128, 8
        $region24: #{tpu_custom_call.1} parent=11 // pred_fallthru
          _
        // Predicated region
        $region25: #{tpu_custom_call.1} parent=11 // pred_check
          %p194 = pneg %p126
        $region26: #{tpu_custom_call.1} parent=11 // pred_check_branch
          %196 = sbr.rel (%p194) target = $region28
        $region27: #{tpu_custom_call.1} parent=11 // pred_region
          _
        $region28: #{tpu_custom_call.1} parent=11 // pred_fallthru
          _
      $region12: #{tpu_custom_call.1} parent=5 // pred_fallthru
        _
      %p197 = scmp.lt.s32.totalorder %s16, 2
      // Predicated region
      $region29: #{tpu_custom_call.1} parent=5 // pred_check
        %p198 = pneg %p197
      $region30: #{tpu_custom_call.1} parent=5 // pred_check_branch
        %200 = sbr.rel (%p198) target = $region32
      $region31: #{tpu_custom_call.1} parent=5 // pred_region
        // Predicated region
        $region33: #{tpu_custom_call.1} parent=31 // pred_check
          %p201 = pneg %p57
        $region34: #{tpu_custom_call.1} parent=31 // pred_check_branch
          %203 = sbr.rel (%p201) target = $region36
        $region35: #{tpu_custom_call.1} parent=31 // pred_region
          %s204 = sand.u32 %s47, 1
          %s205 = scalar_lea.sflag [#allocation4], %s204
          %s206 = sand.u32 %s47, 1
          %s207 = smul.addr %s206, 40
          %s208 = scalar_lea.vmem [#allocation3], %s207
          %s210 = ssub.s32 640, 640
          %211 = vsyncadd %s205, %s210
          %s212 = smul.addr %s16, 5
          %s213 = smul.addr %s212, 128
          %s214 = scalar_lea.hbm %s1, %s213
          %s216 = sshll.u32 %s208, 4
          %s217 = int_to_ptr.vmem [resolvable:$true] %s216
          %219 = dma.hbm_to_vmem [thread:$0]  %s214, 640, %s217, %s205
        $region36: #{tpu_custom_call.1} parent=31 // pred_fallthru
          _
      $region32: #{tpu_custom_call.1} parent=5 // pred_fallthru
        _
      %p220 = scmp.le.s32.totalorder 1, %s16
      %p221 = scmp.lt.s32.totalorder %s16, 3
      %p222 = pnand %p220, %p221
      %p223 = pneg %p222
      // Predicated region
      $region37: #{tpu_custom_call.1} parent=5 // pred_check
        _
      $region38: #{tpu_custom_call.1} parent=5 // pred_check_branch
        %225 = sbr.rel (%p222) target = $region40
      $region39: #{tpu_custom_call.1} parent=5 // pred_region
        %s226 = ssub.s32 %s16, 1
        %s227 = sand.u32 %s50, 1
        %s228 = scalar_lea.sflag [#allocation4], %s227
        %s229 = sand.u32 %s50, 1
        %s230 = smul.addr %s229, 40
        %s231 = scalar_lea.vmem [#allocation3], %s230
        // Predicated region
        $region41: #{tpu_custom_call.1} parent=39 // pred_check
          %p232 = pneg %p63
        $region42: #{tpu_custom_call.1} parent=39 // pred_check_branch
          %234 = sbr.rel (%p232) target = $region44
        $region43: #{tpu_custom_call.1} parent=39 // pred_region
          %235 = dma.done %s228, 640
        $region44: #{tpu_custom_call.1} parent=39 // pred_fallthru
          _
        // Predicated region
        $region45: #{tpu_custom_call.1} parent=39 // pred_check
          %p236 = pneg %p84
        $region46: #{tpu_custom_call.1} parent=39 // pred_check_branch
          %238 = sbr.rel (%p236) target = $region48
        $region47: #{tpu_custom_call.1} parent=39 // pred_region
          %239 = dma.done [#allocation6], 80
        $region48: #{tpu_custom_call.1} parent=39 // pred_fallthru
          _
        // Predicated region
        $region49: #{tpu_custom_call.1} parent=39 // pred_check
          %p240 = pneg %p105
        $region50: #{tpu_custom_call.1} parent=39 // pred_check_branch
          %242 = sbr.rel (%p240) target = $region52
        $region51: #{tpu_custom_call.1} parent=39 // pred_region
          %243 = dma.done [#allocation6], 9600
        $region52: #{tpu_custom_call.1} parent=39 // pred_fallthru
          _
        %p244 = pneg %p37
        %p245 = pneg %p34
        %s246 = sand.u32 %s50, 1
        %s247 = scalar_lea.sflag [#allocation4], %s246
        %s248 = sand.u32 %s50, 1
        %s249 = smul.addr %s248, 40
        %s250 = scalar_lea.vmem [#allocation3], %s249
        %p251 = pneg %p63
        %p252 = pneg %p60
        %p253 = pneg %p84
        %p254 = pneg %p81
        %p255 = pneg %p105
        %p256 = pneg %p102
        %p257 = pneg %p126
        %p258 = pneg %p123
        %p259 = pneg %p152
        %p260 = pneg %p149
        %p261 = scmp.lt.s32.totalorder %s21, 1
        %s262 = scalar_select %p261, %s21, 1
        %s263 = smul.addr %s262, 8
        %s264 = scalar_lea.vmem %s5, %s263
        %p265 = scmp.lt.s32.totalorder %s21, 1
        %s266 = scalar_select %p265, %s21, 1
        %s267 = smul.addr %s266, 8
        %s268 = scalar_lea.vmem %s5, %s267
        %v269 = vld [vmem:[%s231] sm:$0xff]
        %v270 = vld [vmem:[%s231 + $0x8] sm:$0xff]
        %v271 = vld [vmem:[%s231 + $0x10] sm:$0xff]
        %v272 = vld [vmem:[%s231 + $0x18] sm:$0xff]
        %v273 = vld [vmem:[%s231 + $0x20] sm:$0xff]
        %v274 = vld [vmem:[#allocation5] sm:$0x1f]
        %v275 = vld [vmem:[#allocation7] sm:$0xff]
        %v276 = vld [vmem:[#allocation7 + $0x8] sm:$0xff]
        %v277 = vld [vmem:[#allocation7 + $0x10] sm:$0xff]
        %v278 = vld [vmem:[#allocation7 + $0x18] sm:$0xff]
        %v279 = vld [vmem:[#allocation7 + $0x20] sm:$0xff]
        %v280 = vld [vmem:[#allocation7 + $0x28] sm:$0xff]
        %v281 = vld [vmem:[#allocation7 + $0x30] sm:$0xff]
        %v282 = vld [vmem:[#allocation7 + $0x38] sm:$0xff]
        %v283 = vld [vmem:[#allocation7 + $0x40] sm:$0xff]
        %v284 = vld [vmem:[#allocation7 + $0x48] sm:$0xff]
        %v285 = vld [vmem:[#allocation7 + $0x50] sm:$0xff]
        %v286 = vld [vmem:[#allocation7 + $0x58] sm:$0xff]
        %v287 = vld [vmem:[#allocation7 + $0x60] sm:$0xff]
        %v288 = vld [vmem:[#allocation7 + $0x68] sm:$0xff]
        %v289 = vld [vmem:[#allocation7 + $0x70] sm:$0xff]
        %v290 = vld [vmem:[#allocation7 + $0x78] sm:$0xff]
        %v291 = vld [vmem:[#allocation7 + $0x80] sm:$0xff]
        %v292 = vld [vmem:[#allocation7 + $0x88] sm:$0xff]
        %v293 = vld [vmem:[#allocation7 + $0x90] sm:$0xff]
        %v294 = vld [vmem:[#allocation7 + $0x98] sm:$0xff]
        %v295 = vld [vmem:[#allocation7 + $0xa0] sm:$0xff]
        %v296 = vld [vmem:[#allocation7 + $0xa8] sm:$0xff]
        %v297 = vld [vmem:[#allocation7 + $0xb0] sm:$0xff]
        %v298 = vld [vmem:[#allocation7 + $0xb8] sm:$0xff]
        %v299 = vld [vmem:[#allocation7 + $0xc0] sm:$0xff]
        %v300 = vld [vmem:[#allocation7 + $0xc8] sm:$0xff]
        %v301 = vld [vmem:[#allocation7 + $0xd0] sm:$0xff]
        %v302 = vld [vmem:[#allocation7 + $0xd8] sm:$0xff]
        %v303 = vld [vmem:[#allocation7 + $0xe0] sm:$0xff]
        %v304 = vld [vmem:[#allocation7 + $0xe8] sm:$0xff]
        %v305 = vld [vmem:[#allocation7 + $0xf0] sm:$0xff]
        %v306 = vld [vmem:[#allocation7 + $0xf8] sm:$0xff]
        %v307 = vld [vmem:[#allocation7 + $0x100] sm:$0xff]
        %v308 = vld [vmem:[#allocation7 + $0x108] sm:$0xff]
        %v309 = vld [vmem:[#allocation7 + $0x110] sm:$0xff]
        %v310 = vld [vmem:[#allocation7 + $0x118] sm:$0xff]
        %v311 = vld [vmem:[#allocation7 + $0x120] sm:$0xff]
        %v312 = vld [vmem:[#allocation7 + $0x128] sm:$0xff]
        %v313 = vld [vmem:[#allocation7 + $0x130] sm:$0xff]
        %v314 = vld [vmem:[#allocation7 + $0x138] sm:$0xff]
        %v315 = vld [vmem:[#allocation7 + $0x140] sm:$0xff]
        %v316 = vld [vmem:[#allocation7 + $0x148] sm:$0xff]
        %v317 = vld [vmem:[#allocation7 + $0x150] sm:$0xff]
        %v318 = vld [vmem:[#allocation7 + $0x158] sm:$0xff]
        %v319 = vld [vmem:[#allocation7 + $0x160] sm:$0xff]
        %v320 = vld [vmem:[#allocation7 + $0x168] sm:$0xff]
        %v321 = vld [vmem:[#allocation7 + $0x170] sm:$0xff]
        %v322 = vld [vmem:[#allocation7 + $0x178] sm:$0xff]
        %v323 = vld [vmem:[#allocation7 + $0x180] sm:$0xff]
        %v324 = vld [vmem:[#allocation7 + $0x188] sm:$0xff]
        %v325 = vld [vmem:[#allocation7 + $0x190] sm:$0xff]
        %v326 = vld [vmem:[#allocation7 + $0x198] sm:$0xff]
        %v327 = vld [vmem:[#allocation7 + $0x1a0] sm:$0xff]
        %v328 = vld [vmem:[#allocation7 + $0x1a8] sm:$0xff]
        %v329 = vld [vmem:[#allocation7 + $0x1b0] sm:$0xff]
        %v330 = vld [vmem:[#allocation7 + $0x1b8] sm:$0xff]
        %v331 = vld [vmem:[#allocation7 + $0x1c0] sm:$0xff]
        %v332 = vld [vmem:[#allocation7 + $0x1c8] sm:$0xff]
        %v333 = vld [vmem:[#allocation7 + $0x1d0] sm:$0xff]
        %v334 = vld [vmem:[#allocation7 + $0x1d8] sm:$0xff]
        %v335 = vld [vmem:[#allocation7 + $0x1e0] sm:$0xff]
        %v336 = vld [vmem:[#allocation7 + $0x1e8] sm:$0xff]
        %v337 = vld [vmem:[#allocation7 + $0x1f0] sm:$0xff]
        %v338 = vld [vmem:[#allocation7 + $0x1f8] sm:$0xff]
        %v339 = vld [vmem:[#allocation7 + $0x200] sm:$0xff]
        %v340 = vld [vmem:[#allocation7 + $0x208] sm:$0xff]
        %v341 = vld [vmem:[#allocation7 + $0x210] sm:$0xff]
        %v342 = vld [vmem:[#allocation7 + $0x218] sm:$0xff]
        %v343 = vld [vmem:[#allocation7 + $0x220] sm:$0xff]
        %v344 = vld [vmem:[#allocation7 + $0x228] sm:$0xff]
        %v345 = vld [vmem:[#allocation7 + $0x230] sm:$0xff]
        %v346 = vld [vmem:[#allocation7 + $0x238] sm:$0xff]
        %v347 = vld [vmem:[#allocation7 + $0x240] sm:$0xff]
        %v348 = vld [vmem:[#allocation7 + $0x248] sm:$0xff]
        %v349 = vld [vmem:[#allocation7 + $0x250] sm:$0xff]
        %v350 = vld [vmem:[%s4] sm:$0x1f]
        %v351 = vmul.f32 %v269, %v269
        %v352 = vmul.f32 %v270, %v270
        %v353 = vmul.f32 %v271, %v271
        %v354 = vmul.f32 %v272, %v272
        %v355 = vmul.f32 %v273, %v273
        %v357 = vlaneseq
        %v358 = vshrl.u32 %v357, 7
        %v359 = vsub.s32 0, %v358
        %v360 = vrot.slane %v274, %v359
        %v361 = vlaneseq
        %v362 = vshrl.u32 %v361, 7
        %v363 = vsub.s32 1, %v362
        %v364 = vrot.slane %v274, %v363
        %v365 = vlaneseq
        %v366 = vshrl.u32 %v365, 7
        %v367 = vsub.s32 2, %v366
        %v368 = vrot.slane %v274, %v367
        %v369 = vlaneseq
        %v370 = vshrl.u32 %v369, 7
        %v371 = vsub.s32 3, %v370
        %v372 = vrot.slane %v274, %v371
        %v373 = vlaneseq
        %v374 = vshrl.u32 %v373, 7
        %v375 = vsub.s32 4, %v374
        %v376 = vrot.slane %v274, %v375
        %v382 = vmul.f32 %v269, %v360
        %v383 = vmul.f32 %v270, %v364
        %v384 = vmul.f32 %v271, %v368
        %v385 = vmul.f32 %v272, %v372
        %v386 = vmul.f32 %v273, %v376
        %v387 = vmul.f32 %v351, 0.5
        %v388 = vmul.f32 %v352, 0.5
        %v389 = vmul.f32 %v353, 0.5
        %v390 = vmul.f32 %v354, 0.5
        %v391 = vmul.f32 %v355, 0.5
        %v393 = vlaneseq
        %v394 = vshrl.u32 %v393, 7
        %v395 = vsub.s32 0, %v394
        %v396 = vrot.slane %v350, %v395
        %v397 = vlaneseq
        %v398 = vshrl.u32 %v397, 7
        %v399 = vsub.s32 1, %v398
        %v400 = vrot.slane %v350, %v399
        %v401 = vlaneseq
        %v402 = vshrl.u32 %v401, 7
        %v403 = vsub.s32 2, %v402
        %v404 = vrot.slane %v350, %v403
        %v405 = vlaneseq
        %v406 = vshrl.u32 %v405, 7
        %v407 = vsub.s32 3, %v406
        %v408 = vrot.slane %v350, %v407
        %v409 = vlaneseq
        %v410 = vshrl.u32 %v409, 7
        %v411 = vsub.s32 4, %v410
        %v412 = vrot.slane %v350, %v411
        %v418 = vmul.f32 %v387, %v396
        %v419 = vmul.f32 %v388, %v400
        %v420 = vmul.f32 %v389, %v404
        %v421 = vmul.f32 %v390, %v408
        %v422 = vmul.f32 %v391, %v412
        %v423 = vsub.f32 %v382, %v418
        %v424 = vsub.f32 %v383, %v419
        %v425 = vsub.f32 %v384, %v420
        %v426 = vsub.f32 %v385, %v421
        %v427 = vsub.f32 %v386, %v422
        %v428 = vadd.f32 %v423, %v424
        %v429 = vadd.f32 %v428, %v425
        %v430 = vadd.f32 %v429, %v426
        %vm431 = vcmask 719872
        %v432 = vsel %vm431, %v427, 0.0
        %v433 = vadd.f32 %v430, %v432
        %434 = vadd.xlane.f32.xlu0 %v433
        %v435 = vpop.xlane.xlu0 %434
        %v437 = vsel %vm431, %v273, 0
        %439 = vmatprep.subr.mxu0 0.0
        %440 = vmatpush1.msra.mxu0 %v290
        %441 = vmatprep.subr.mxu0 0.0
        %442 = vmatpush1.msra.mxu0 %v289
        %443 = vmatprep.subr.mxu0 0.0
        %444 = vmatpush1.msra.mxu0 %v288
        %445 = vmatprep.subr.mxu0 0.0
        %446 = vmatpush1.msra.mxu0 %v287
        %447 = vmatprep.subr.mxu0 0.0
        %448 = vmatpush1.msra.mxu0 %v286
        %449 = vmatprep.subr.mxu0 0.0
        %450 = vmatpush1.msra.mxu0 %v285
        %451 = vmatprep.subr.mxu0 0.0
        %452 = vmatpush1.msra.mxu0 %v284
        %453 = vmatprep.subr.mxu0 0.0
        %454 = vmatpush1.msra.mxu0 %v283
        %455 = vmatprep.subr.mxu0 0.0
        %456 = vmatpush1.msra.mxu0 %v282
        %457 = vmatprep.subr.mxu0 0.0
        %458 = vmatpush1.msra.mxu0 %v281
        %459 = vmatprep.subr.mxu0 0.0
        %460 = vmatpush1.msra.mxu0 %v280
        %461 = vmatprep.subr.mxu0 0.0
        %462 = vmatpush1.msra.mxu0 %v279
        %463 = vmatprep.subr.mxu0 0.0
        %464 = vmatpush1.msra.mxu0 %v278
        %465 = vmatprep.subr.mxu0 0.0
        %466 = vmatpush1.msra.mxu0 %v277
        %467 = vmatprep.subr.mxu0 0.0
        %468 = vmatpush1.msra.mxu0 %v276
        %469 = vmatprep.subr.mxu0 0.0
        %470 = vmatpush1.msra.mxu0 %v275
        %471 = vmatprep.subr.mxu0 0.0
        %472 = vmatpush2.msra.mxu0 %v306
        %473 = vmatprep.subr.mxu0 0.0
        %474 = vmatpush2.msra.mxu0 %v305
        %475 = vmatprep.subr.mxu0 0.0
        %476 = vmatpush2.msra.mxu0 %v304
        %477 = vmatprep.subr.mxu0 0.0
        %478 = vmatpush2.msra.mxu0 %v303
        %479 = vmatprep.subr.mxu0 0.0
        %480 = vmatpush2.msra.mxu0 %v302
        %481 = vmatprep.subr.mxu0 0.0
        %482 = vmatpush2.msra.mxu0 %v301
        %483 = vmatprep.subr.mxu0 0.0
        %484 = vmatpush2.msra.mxu0 %v300
        %485 = vmatprep.subr.mxu0 0.0
        %486 = vmatpush2.msra.mxu0 %v299
        %487 = vmatprep.subr.mxu0 0.0
        %488 = vmatpush2.msra.mxu0 %v298
        %489 = vmatprep.subr.mxu0 0.0
        %490 = vmatpush2.msra.mxu0 %v297
        %491 = vmatprep.subr.mxu0 0.0
        %492 = vmatpush2.msra.mxu0 %v296
        %493 = vmatprep.subr.mxu0 0.0
        %494 = vmatpush2.msra.mxu0 %v295
        %495 = vmatprep.subr.mxu0 0.0
        %496 = vmatpush2.msra.mxu0 %v294
        %497 = vmatprep.subr.mxu0 0.0
        %498 = vmatpush2.msra.mxu0 %v293
        %499 = vmatprep.subr.mxu0 0.0
        %500 = vmatpush2.msra.mxu0 %v292
        %501 = vmatprep.subr.mxu0 0.0
        %502 = vmatpush2.msra.mxu0 %v291
        %503 = vmatprep.mubr.f32.mxu0 %v270
        %504 = vmatmul.mubr.f32.gmra.mxu0 %v269
        %v505 = vpop.f32.mrf.mxu0
        %v506 = vadd.f32 0.0, %v505
        %v507 = vpop.f32.mrf.mxu0
        %508 = vdwg.mxu0
        %509 = vmatprep.subr.mxu0 0.0
        %510 = vmatpush1.msra.mxu0 %v322
        %511 = vmatprep.subr.mxu0 0.0
        %512 = vmatpush1.msra.mxu0 %v321
        %513 = vmatprep.subr.mxu0 0.0
        %514 = vmatpush1.msra.mxu0 %v320
        %515 = vmatprep.subr.mxu0 0.0
        %516 = vmatpush1.msra.mxu0 %v319
        %517 = vmatprep.subr.mxu0 0.0
        %518 = vmatpush1.msra.mxu0 %v318
        %519 = vmatprep.subr.mxu0 0.0
        %520 = vmatpush1.msra.mxu0 %v317
        %521 = vmatprep.subr.mxu0 0.0
        %522 = vmatpush1.msra.mxu0 %v316
        %523 = vmatprep.subr.mxu0 0.0
        %524 = vmatpush1.msra.mxu0 %v315
        %525 = vmatprep.subr.mxu0 0.0
        %526 = vmatpush1.msra.mxu0 %v314
        %527 = vmatprep.subr.mxu0 0.0
        %528 = vmatpush1.msra.mxu0 %v313
        %529 = vmatprep.subr.mxu0 0.0
        %530 = vmatpush1.msra.mxu0 %v312
        %531 = vmatprep.subr.mxu0 0.0
        %532 = vmatpush1.msra.mxu0 %v311
        %533 = vmatprep.subr.mxu0 0.0
        %534 = vmatpush1.msra.mxu0 %v310
        %535 = vmatprep.subr.mxu0 0.0
        %536 = vmatpush1.msra.mxu0 %v309
        %537 = vmatprep.subr.mxu0 0.0
        %538 = vmatpush1.msra.mxu0 %v308
        %539 = vmatprep.subr.mxu0 0.0
        %540 = vmatpush1.msra.mxu0 %v307
        %541 = vmatprep.subr.mxu0 0.0
        %542 = vmatpush2.msra.mxu0 %v338
        %543 = vmatprep.subr.mxu0 0.0
        %544 = vmatpush2.msra.mxu0 %v337
        %545 = vmatprep.subr.mxu0 0.0
        %546 = vmatpush2.msra.mxu0 %v336
        %547 = vmatprep.subr.mxu0 0.0
        %548 = vmatpush2.msra.mxu0 %v335
        %549 = vmatprep.subr.mxu0 0.0
        %550 = vmatpush2.msra.mxu0 %v334
        %551 = vmatprep.subr.mxu0 0.0
        %552 = vmatpush2.msra.mxu0 %v333
        %553 = vmatprep.subr.mxu0 0.0
        %554 = vmatpush2.msra.mxu0 %v332
        %555 = vmatprep.subr.mxu0 0.0
        %556 = vmatpush2.msra.mxu0 %v331
        %557 = vmatprep.subr.mxu0 0.0
        %558 = vmatpush2.msra.mxu0 %v330
        %559 = vmatprep.subr.mxu0 0.0
        %560 = vmatpush2.msra.mxu0 %v329
        %561 = vmatprep.subr.mxu0 0.0
        %562 = vmatpush2.msra.mxu0 %v328
        %563 = vmatprep.subr.mxu0 0.0
        %564 = vmatpush2.msra.mxu0 %v327
        %565 = vmatprep.subr.mxu0 0.0
        %566 = vmatpush2.msra.mxu0 %v326
        %567 = vmatprep.subr.mxu0 0.0
        %568 = vmatpush2.msra.mxu0 %v325
        %569 = vmatprep.subr.mxu0 0.0
        %570 = vmatpush2.msra.mxu0 %v324
        %571 = vmatprep.subr.mxu0 0.0
        %572 = vmatpush2.msra.mxu0 %v323
        %573 = vmatprep.mubr.f32.mxu0 %v272
        %574 = vmatmul.mubr.f32.gmra.mxu0 %v271
        %v575 = vpop.f32.mrf.mxu0
        %v576 = vadd.f32 %v506, %v575
        %v577 = vpop.f32.mrf.mxu0
        %578 = vdwg.mxu0
        %579 = vmatprep.subr.mxu0 0.0
        %580 = vmatpush1.msra.mxu0 0.0
        %581 = vmatprep.subr.mxu0 0.0
        %582 = vmatpush1.msra.mxu0 0.0
        %583 = vmatprep.subr.mxu0 0.0
        %584 = vmatpush1.msra.mxu0 0.0
        %585 = vmatprep.subr.mxu0 0.0
        %586 = vmatpush1.msra.mxu0 0.0
        %587 = vmatprep.subr.mxu0 0.0
        %588 = vmatpush1.msra.mxu0 0.0
        %589 = vmatprep.subr.mxu0 0.0
        %590 = vmatpush1.msra.mxu0 %v349
        %591 = vmatprep.subr.mxu0 0.0
        %592 = vmatpush1.msra.mxu0 %v348
        %593 = vmatprep.subr.mxu0 0.0
        %594 = vmatpush1.msra.mxu0 %v347
        %595 = vmatprep.subr.mxu0 0.0
        %596 = vmatpush1.msra.mxu0 %v346
        %597 = vmatprep.subr.mxu0 0.0
        %598 = vmatpush1.msra.mxu0 %v345
        %599 = vmatprep.subr.mxu0 0.0
        %600 = vmatpush1.msra.mxu0 %v344
        %601 = vmatprep.subr.mxu0 0.0
        %602 = vmatpush1.msra.mxu0 %v343
        %603 = vmatprep.subr.mxu0 0.0
        %604 = vmatpush1.msra.mxu0 %v342
        %605 = vmatprep.subr.mxu0 0.0
        %606 = vmatpush1.msra.mxu0 %v341
        %607 = vmatprep.subr.mxu0 0.0
        %608 = vmatpush1.msra.mxu0 %v340
        %609 = vmatprep.subr.mxu0 0.0
        %610 = vmatpush1.msra.mxu0 %v339
        %611 = vmatprep.subr.mxu0 0.0
        %612 = vmatpush2.msra.mxu0 0.0
        %613 = vmatprep.subr.mxu0 0.0
        %614 = vmatpush2.msra.mxu0 0.0
        %615 = vmatprep.subr.mxu0 0.0
        %616 = vmatpush2.msra.mxu0 0.0
        %617 = vmatprep.subr.mxu0 0.0
        %618 = vmatpush2.msra.mxu0 0.0
        %619 = vmatprep.subr.mxu0 0.0
        %620 = vmatpush2.msra.mxu0 0.0
        %621 = vmatprep.subr.mxu0 0.0
        %622 = vmatpush2.msra.mxu0 0.0
        %623 = vmatprep.subr.mxu0 0.0
        %624 = vmatpush2.msra.mxu0 0.0
        %625 = vmatprep.subr.mxu0 0.0
        %626 = vmatpush2.msra.mxu0 0.0
        %627 = vmatprep.subr.mxu0 0.0
        %628 = vmatpush2.msra.mxu0 0.0
        %629 = vmatprep.subr.mxu0 0.0
        %630 = vmatpush2.msra.mxu0 0.0
        %631 = vmatprep.subr.mxu0 0.0
        %632 = vmatpush2.msra.mxu0 0.0
        %633 = vmatprep.subr.mxu0 0.0
        %634 = vmatpush2.msra.mxu0 0.0
        %635 = vmatprep.subr.mxu0 0.0
        %636 = vmatpush2.msra.mxu0 0.0
        %637 = vmatprep.subr.mxu0 0.0
        %638 = vmatpush2.msra.mxu0 0.0
        %639 = vmatprep.subr.mxu0 0.0
        %640 = vmatpush2.msra.mxu0 0.0
        %641 = vmatprep.subr.mxu0 0.0
        %642 = vmatpush2.msra.mxu0 0.0
        %643 = vmatprep.mubr.f32.mxu0 0.0
        %644 = vmatmul.mubr.f32.gmra.mxu0 %v437
        %v645 = vpop.f32.mrf.mxu0
        %v646 = vadd.f32 %v576, %v645
        %v647 = vpop.f32.mrf.mxu0
        %648 = vdwg.mxu0
        %v649 = vmul.f32 %v646, %v646
        %650 = vadd.xlane.f32.xlu0 %v649
        %v651 = vpop.xlane.xlu0 %650
        %v652 = vmul.f32 %v651, 0.5
        %v653 = vadd.f32 %v435, %v652
        %s654 = sld [smem:[#allocation2]]
        %v655 = vstv %s654
        %v656 = vadd.f32 %v653, %v655
        %vm657 = vcmask 7168
        %658 = vst.msk [vmem:[%s268] sm:$0xff] %vm657, %v656
        %p659 = scmp.lt.s32.totalorder %s21, 1
        %s660 = scalar_select %p659, %s21, 1
        %s661 = smul.addr %s660, 8
        %s662 = scalar_lea.vmem %s5, %s661
        // Predicated region
        $region53: #{tpu_custom_call.1} parent=39 // pred_check
          %p663 = pneg %p149
        $region54: #{tpu_custom_call.1} parent=39 // pred_check_branch
          %665 = sbr.rel (%p663) target = $region56
        $region55: #{tpu_custom_call.1} parent=39 // pred_region
          _
        $region56: #{tpu_custom_call.1} parent=39 // pred_fallthru
          _
      $region40: #{tpu_custom_call.1} parent=5 // pred_fallthru
        _
      %p666 = scmp.le.s32.totalorder 2, %s16
      // Predicated region
      $region57: #{tpu_custom_call.1} parent=5 // pred_check
        %p667 = pneg %p666
      $region58: #{tpu_custom_call.1} parent=5 // pred_check_branch
        %669 = sbr.rel (%p667) target = $region60
      $region59: #{tpu_custom_call.1} parent=5 // pred_region
        %s670 = ssub.s32 %s16, 2
        // Predicated region
        $region61: #{tpu_custom_call.1} parent=59 // pred_check
          %p671 = pneg %p155
        $region62: #{tpu_custom_call.1} parent=59 // pred_check_branch
          %673 = sbr.rel (%p671) target = $region64
        $region63: #{tpu_custom_call.1} parent=59 // pred_region
          %p674 = scmp.lt.s32.totalorder %s22, 1
          %s675 = scalar_select %p674, %s22, 1
          %s676 = smul.addr %s675, 8
          %s677 = scalar_lea.vmem %s5, %s676
        $region64: #{tpu_custom_call.1} parent=59 // pred_fallthru
          _
      $region60: #{tpu_custom_call.1} parent=5 // pred_fallthru
        _
    $region6: #{tpu_custom_call.1} parent=1 // loop_footer
      %s20 = sadd.s32 1, %s16
    $region7: #{tpu_custom_call.1} parent=1 // loop_footer_branch
      %15 = sbr.rel target = $region3
    $region8: #{tpu_custom_call.1} parent=1 // loop_exit
      _
    %678 = vsyncpa [#allocation4], 1
    %s679 = scalar_lea.sflag [#allocation4], 1
    %680 = vsyncpa %s679, 1
    %681 = vsyncpa [#allocation6], 1

</llo_original>
